<compile_context>
chip_gen: v7x
topology: tpu7x:2x2x1
jax: 0.10.0
libtpu: 0.0.40
codegen_flags: <defaults>
</compile_context>

<pallas_src>
import jax
import jax.numpy as jnp
from jax.experimental import pallas as pl
from jax.experimental.pallas import tpu as pltpu


def _cdiv(a, b):
    return (a + b - 1) // b


def _round_up(x, m):
    return _cdiv(x, m) * m


def _padded_rows(rows, dtype):
    """Rows after Mosaic's sublane padding for a (rows, tL) VMEM block."""
    itemsize = jnp.dtype(dtype).itemsize
    sublane = 8 * max(1, 4 // itemsize)      # 8 (f32), 16 (bf16), 32 (int8/fp8)
    return _round_up(rows, sublane)


def _device_budgets():
    """Generation-aware (per-step combined input byte budget, vmem_limit_bytes)."""
    vmem_bytes = 64 * 1024 * 1024            # conservative (v7x-like) fallback
    try:
        vmem_bytes = int(pltpu.get_tpu_info().vmem_capacity_bytes)
    except Exception:
        pass
    if vmem_bytes <= 64 * 1024 * 1024:
        # v7x-class: 64 MiB per TensorCore. 2 inputs x 2 pipeline buffers of a
        # ~6 MiB combined block stays well inside a 44 MiB scoped limit.
        return 6 * 1024 * 1024, 44 * 1024 * 1024
    # v5e / v6e: 128 MiB physical VMEM. Bigger steps amortize the ~0.35 us
    # per-grid-step fixed cost against 0.8-1.4 TB/s HBM.
    return 14 * 1024 * 1024, 80 * 1024 * 1024


def _pick_lane_tile(L, per_lane_bytes, block_budget):
    """Choose (tile_L, padded_L, num_tiles).

    tile_L is the full L (single full-extent block) only when L is too small to
    split into >=128-lane tiles; otherwise it is a multiple of 128 chosen so
    one grid step's combined input bytes stay under block_budget, with >= 2
    tiles so both v7x TensorCores get work and DMA/compute overlap."""
    if L < 256:
        return L, L, 1

    Lp = _round_up(L, 128)
    cap_budget = max(128, (block_budget // max(1, per_lane_bytes)) // 128 * 128)
    cap_split = max(128, (Lp // 2) // 128 * 128)   # guarantees >= 2 tiles
    cap = min(cap_budget, cap_split)

    # Prefer an exact 128-multiple divisor of Lp (no extra padding) as long as
    # it is at least ~half the budget cap — never fall back to tiny tiles.
    tile = None
    t = cap
    while t >= max(128, cap // 2):
        if Lp % t == 0:
            tile = t
            break
        t -= 128
    if tile is None:
        n = max(2, _cdiv(Lp, cap))
        if n % 2:
            n += 1                                  # even tile count
        tile = min(cap, _round_up(_cdiv(Lp, n), 128))

    num_tiles = _cdiv(Lp, tile)
    if num_tiles % 2 and num_tiles < 8:
        # Small odd counts leave one TensorCore idle for a visible fraction.
        alt = _round_up(_cdiv(Lp, num_tiles + 1), 128)
        if 128 <= alt <= cap:
            tile = alt
            num_tiles = _cdiv(Lp, tile)
    return tile, num_tiles * tile, num_tiles


def _make_wmse_kernel(B, C, Ct):
    def kernel(yp_ref, yt_ref, out_ref):
        # yp_ref : (B*C,  tL)  predictions slab
        # yt_ref : (B*Ct, tL)  y_true slab; row b*Ct + (Ct-1) = batch b weights
        # out_ref: (1, 1) SMEM partial:
        #          sum_l (sum_b w[b,l]) * (sum_{b,c} (yp[b,c,l]-yt[b,c,l])^2)
        tL = yp_ref.shape[-1]
        if Ct == C:
            # Weight channel is also the last target channel: the two slabs are
            # row-aligned, so the whole tile is one dense elementwise pass.
            yp = yp_ref[...].astype(jnp.float32)
            yt = yt_ref[...].astype(jnp.float32)
            diff = yp - yt
            d_sum = jnp.sum(diff * diff, axis=0, keepdims=True)        # (1, tL)
            row = jax.lax.broadcasted_iota(jnp.int32, yt.shape, 0)
            w_sum = jnp.sum(jnp.where(row % Ct == Ct - 1, yt, 0.0),
                            axis=0, keepdims=True)                     # (1, tL)
        else:
            d_sum = jnp.zeros((1, tL), jnp.float32)
            w_sum = jnp.zeros((1, tL), jnp.float32)
            for b in range(B):   # static unroll; VPU/XLU work hides under DMA
                yp_b = yp_ref[b * C:(b + 1) * C, :].astype(jnp.float32)
                yt_b = yt_ref[b * Ct:b * Ct + C, :].astype(jnp.float32)
                w_b = yt_ref[b * Ct + Ct - 1:b * Ct + Ct, :].astype(jnp.float32)
                diff = yp_b - yt_b
                d_sum = d_sum + jnp.sum(diff * diff, axis=0, keepdims=True)
                w_sum = w_sum + w_b
        out_ref[0, 0] = jnp.sum(w_sum * d_sum)       # per-tile partial scalar
    return kernel


def weight_matrix_mse_loss(y_pred, y_true):
    """Pallas implementation of WeightMatrixMSELoss.forward.

    y_pred: (B, C, L); y_true: (B, Ct, L) with Ct >= C and y_true[:, -1, :]
    holding the per-(batch, position) weights.  Returns a float32 scalar that
    matches the PyTorch module (including its (B,1,L)*(B,L)->(B,B,L) broadcast).
    """
    B, C, L = y_pred.shape
    Bt, Ct, Lt = y_true.shape
    assert Bt == B and Lt == L and Ct >= C, (y_pred.shape, y_true.shape)

    # Lane-dense 2-D slabs (free reshapes; HBM layout is unchanged).
    yp2 = y_pred.reshape(B * C, L)
    yt2 = y_true.reshape(B * Ct, L)

    block_budget, vmem_limit = _device_budgets()

    # Bytes per lane of one grid step's combined inputs, counting the sublane
    # padding Mosaic applies to the (rows, tL) VMEM blocks.
    per_lane = (_padded_rows(B * C, yp2.dtype) * yp2.dtype.itemsize
                + _padded_rows(B * Ct, yt2.dtype) * yt2.dtype.itemsize)
    tL, Lp, num_tiles = _pick_lane_tile(L, per_lane, block_budget)

    if Lp != L:
        # Zero padding is numerically neutral: padded lanes have w == 0 and
        # diff == 0, and the denominator below uses the original L.
        yp2 = jnp.pad(yp2, ((0, 0), (0, Lp - L)))
        yt2 = jnp.pad(yt2, ((0, 0), (0, Lp - L)))

    bytes_accessed = (yp2.size * yp2.dtype.itemsize
                      + yt2.size * yt2.dtype.itemsize
                      + num_tiles * 4)
    cost = pl.CostEstimate(
        flops=4 * B * C * Lp + 2 * B * Lp,
        transcendentals=0,
        bytes_accessed=int(bytes_accessed),
    )

    partials = pl.pallas_call(
        _make_wmse_kernel(B, C, Ct),
        out_shape=jax.ShapeDtypeStruct((num_tiles, 1), jnp.float32),
        grid=(num_tiles,),
        in_specs=[
            pl.BlockSpec((B * C, tL), lambda l: (0, l)),
            pl.BlockSpec((B * Ct, tL), lambda l: (0, l)),
        ],
        out_specs=pl.BlockSpec((1, 1), lambda l: (l, 0),
                               memory_space=pltpu.SMEM),
        compiler_params=pltpu.CompilerParams(
            dimension_semantics=("parallel",),
            vmem_limit_bytes=vmem_limit,
        ),
        cost_estimate=cost,
    )(yp2, yt2)

    denom = jnp.float32(B) * jnp.float32(B) * jnp.float32(L)
    return jnp.sum(partials) / denom


def _reference(y_pred, y_true):
    # Faithful re-implementation of the PyTorch forward (with its broadcast).
    num_channels = y_pred.shape[1]
    w = y_true[:, -1, :][:, None, :]                        # (B, 1, L)
    loss = 0.0
    for c in range(num_channels):
        loss = loss + w * (y_pred[:, c, :] - y_true[:, c, :]) ** 2   # (B, B, L)
    return jnp.mean(loss)


if __name__ == "__main__":
    key = jax.random.PRNGKey(0)
    k1, k2, k3, k4, k5, k6, k7, k8 = jax.random.split(key, 8)

    # --- Main check: the module's canonical shape (B=2, C=4, L=16, Ct=C+1) ---
    B, C, L = 2, 4, 16
    Ct = C + 1  # last channel of y_true carries the weights
    y_pred = jax.random.normal(k1, (B, C, L), dtype=jnp.float32)
    targets = jax.random.normal(k2, (B, C, L), dtype=jnp.float32)
    weights = jax.random.uniform(k3, (B, 1, L), dtype=jnp.float32)
    y_true = jnp.concatenate([targets, weights], axis=1)    # (B, Ct, L)

    loss = weight_matrix_mse_loss(y_pred, y_true)
    jax.block_until_ready(loss)
    ref = _reference(y_pred, y_true)
    assert jnp.allclose(loss, ref, rtol=1e-5, atol=1e-5), (loss, ref)

    # --- Multi-tile + lane-padding path (L not a multiple of 128) ---
    L2 = 576
    y_pred2 = jax.random.normal(k4, (B, C, L2), dtype=jnp.float32)
    targets2 = jax.random.normal(k5, (B, C, L2), dtype=jnp.float32)
    weights2 = jax.random.uniform(k6, (B, 1, L2), dtype=jnp.float32)
    y_true2 = jnp.concatenate([targets2, weights2], axis=1)
    loss2 = weight_matrix_mse_loss(y_pred2, y_true2)
    jax.block_until_ready(loss2)
    ref2 = _reference(y_pred2, y_true2)
    assert jnp.allclose(loss2, ref2, rtol=1e-5, atol=1e-5), (loss2, ref2)

    # --- Ct == C path (weight is the last target channel itself) ---
    y_pred3 = jax.random.normal(k7, (B, C, L), dtype=jnp.float32)
    y_true3 = jax.random.normal(k8, (B, C, L), dtype=jnp.float32)
    loss3 = weight_matrix_mse_loss(y_pred3, y_true3)
    jax.block_until_ready(loss3)
    ref3 = _reference(y_pred3, y_true3)
    assert jnp.allclose(loss3, ref3, rtol=1e-5, atol=1e-5), (loss3, ref3)

    print("KERNEL_OK")
</pallas_src>

<mosaic_0001>
module attributes {stable_mosaic.version = 11 : i64} {
  func.func @kernel(%arg0: i32, %arg1: memref<8x16xf32, #tpu.memory_space<vmem>>, %arg2: memref<10x16xf32, #tpu.memory_space<vmem>>, %arg3: memref<1x1xf32, #tpu.memory_space<smem>>) attributes {dimension_semantics = [#tpu.dimension_semantics<parallel>], iteration_bounds = array<i64: 1>, scalar_prefetch = 0 : i64, scratch_operands = 0 : i64, tpu.core_type = #tpu.core_type<tc>, window_params = [{transform_indices = @transform_0, window_bounds = array<i64: 8, 16>}, {transform_indices = @transform_1, window_bounds = array<i64: 10, 16>}, {transform_indices = @transform_2, window_bounds = array<i64: 1, 1>}]} {
    %cst = arith.constant 0.000000e+00 : f32
    %0 = vector.broadcast %cst : f32 to vector<1x16xf32>
    %cst_0 = arith.constant 0.000000e+00 : f32
    %1 = vector.broadcast %cst_0 : f32 to vector<1x16xf32>
    %c0 = arith.constant 0 : index
    %c0_1 = arith.constant 0 : index
    %2 = vector.load %arg1[%c0, %c0_1] : memref<8x16xf32, #tpu.memory_space<vmem>>, vector<4x16xf32>
    %c0_2 = arith.constant 0 : index
    %c0_3 = arith.constant 0 : index
    %3 = vector.load %arg2[%c0_2, %c0_3] : memref<10x16xf32, #tpu.memory_space<vmem>>, vector<4x16xf32>
    %c4 = arith.constant 4 : index
    %c0_4 = arith.constant 0 : index
    %4 = vector.load %arg2[%c4, %c0_4] : memref<10x16xf32, #tpu.memory_space<vmem>>, vector<1x16xf32>
    %5 = arith.subf %2, %3 : vector<4x16xf32>
    %6 = arith.mulf %5, %5 : vector<4x16xf32>
    %cst_5 = arith.constant dense<0.000000e+00> : vector<16xf32>
    %7 = vector.multi_reduction <add>, %6, %cst_5 [0] : vector<4x16xf32> to vector<16xf32>
    %8 = vector.shape_cast %7 : vector<16xf32> to vector<1x16xf32>
    %9 = arith.addf %0, %8 : vector<1x16xf32>
    %10 = arith.addf %1, %4 : vector<1x16xf32>
    %c4_6 = arith.constant 4 : index
    %c0_7 = arith.constant 0 : index
    %11 = vector.load %arg1[%c4_6, %c0_7] : memref<8x16xf32, #tpu.memory_space<vmem>>, vector<4x16xf32>
    %c5 = arith.constant 5 : index
    %c0_8 = arith.constant 0 : index
    %12 = vector.load %arg2[%c5, %c0_8] : memref<10x16xf32, #tpu.memory_space<vmem>>, vector<4x16xf32>
    %c9 = arith.constant 9 : index
    %c0_9 = arith.constant 0 : index
    %13 = vector.load %arg2[%c9, %c0_9] : memref<10x16xf32, #tpu.memory_space<vmem>>, vector<1x16xf32>
    %14 = arith.subf %11, %12 : vector<4x16xf32>
    %15 = arith.mulf %14, %14 : vector<4x16xf32>
    %cst_10 = arith.constant dense<0.000000e+00> : vector<16xf32>
    %16 = vector.multi_reduction <add>, %15, %cst_10 [0] : vector<4x16xf32> to vector<16xf32>
    %17 = vector.shape_cast %16 : vector<16xf32> to vector<1x16xf32>
    %18 = arith.addf %9, %17 : vector<1x16xf32>
    %19 = arith.addf %10, %13 : vector<1x16xf32>
    %20 = arith.mulf %19, %18 : vector<1x16xf32>
    %21 = vector.shape_cast %20 : vector<1x16xf32> to vector<1x1x16xf32>
    %cst_11 = arith.constant dense<0.000000e+00> : vector<1xf32>
    %22 = vector.multi_reduction <add>, %21, %cst_11 [1, 2] : vector<1x1x16xf32> to vector<1xf32>
    %23 = vector.shape_cast %22 : vector<1xf32> to vector<1x1x1xf32>
    %24 = vector.extract %23[0, 0, 0] : f32 from vector<1x1x1xf32>
    %c0_12 = arith.constant 0 : index
    %c0_13 = arith.constant 0 : index
    %25 = memref.load %arg3[%c0_12, %c0_13] : memref<1x1xf32, #tpu.memory_space<smem>>
    memref.store %24, %arg3[%c0_12, %c0_13] : memref<1x1xf32, #tpu.memory_space<smem>>
    return
  }
  func.func @transform_0(%arg0: i32) -> (i32, i32) {
    %c0_i32 = arith.constant 0 : i32
    %c0_i32_0 = arith.constant 0 : i32
    return %c0_i32, %arg0 : i32, i32
  }
  func.func @transform_1(%arg0: i32) -> (i32, i32) {
    %c0_i32 = arith.constant 0 : i32
    %c0_i32_0 = arith.constant 0 : i32
    return %c0_i32, %arg0 : i32, i32
  }
  func.func @transform_2(%arg0: i32) -> (i32, i32) {
    %c0_i32 = arith.constant 0 : i32
    %c0_i32_0 = arith.constant 0 : i32
    return %arg0, %c0_i32 : i32, i32
  }
}

</mosaic_0001>

<llo_original>
// kernel: tpu_custom_call.1
$region0: #{tpu_custom_call.1}
  #allocation0 [shape = 'u32[]', space=smem, size = 0x4, offset = 0x4, fixed_abs, tag = 'smem constant byte address 0x4 - core index']
  #allocation1 [shape = 'u32[144,128]{1,0:T(1,128)}', space=vmem, size = 0x12000, scoped, tag = 'internal scratch']
  %s0 = inlined_call_operand.hbm [shape: f32[8,16], index: 0, kind: input, shape index: {}]
  %s1 = inlined_call_operand.hbm [shape: f32[10,16], index: 1, kind: input, shape index: {}]
  %s2 = inlined_call_operand.hbm [shape: f32[1,1], index: 2, kind: output, shape index: {}]
  %s3 = sld [smem:[#allocation0]]
  $region26: #{tpu_custom_call.1} parent=0
    _
  %s5 = ssub.s32 1, %s3
  %s6 = scalar_select 0, %s5, %s3
  $region1: #{tpu_custom_call.1} parent=0
    #allocation2 [shape = 'u8[4096]{0}', space=vmem, size = 0x1000, scoped, tag = 'input window, operand 0, single buffered']
    #allocation3 [shape = 's32[1]{0}', space=sflag, size = 0x4, scoped, tag = 'scoped memory for tpu_custom_call.1']
    #allocation4 [shape = 's32[1]{0}', space=sflag, size = 0x4, scoped, tag = 'scoped memory for tpu_custom_call.1']
    #allocation5 [shape = 'u8[8192]{0}', space=vmem, size = 0x2000, scoped, tag = 'input window, operand 1, single buffered']
    #allocation6 [shape = 's32[1]{0}', space=sflag, size = 0x4, scoped, tag = 'scoped memory for tpu_custom_call.1']
    #allocation7 [shape = 'u8[512]{0}', space=smem, size = 0x200, scoped, tag = 'output window, operand 0, single buffered']
    %7 = vsyncpa [#allocation3], 0
    %8 = vsyncpa [#allocation6], 0
    %9 = vsyncpa [#allocation4], 0
    // Predicated region
    $region2: #{tpu_custom_call.1} parent=1 // pred_check
      _
    $region3: #{tpu_custom_call.1} parent=1 // pred_check_branch
      %11 = sbr.rel (0) target = $region5
    $region4: #{tpu_custom_call.1} parent=1 // pred_region
      %s13 = ssub.s32 128, 128
      %14 = vsyncadd [#allocation3], %s13
      %s16 = sshll.u32 [#allocation2], 4
      %s17 = int_to_ptr.vmem [resolvable:$true] %s16
      %19 = dma.hbm_to_vmem [thread:$0]  %s0, 128, %s17, [#allocation3]
    $region5: #{tpu_custom_call.1} parent=1 // pred_fallthru
      _
    // Predicated region
    $region6: #{tpu_custom_call.1} parent=1 // pred_check
      _
    $region7: #{tpu_custom_call.1} parent=1 // pred_check_branch
      %21 = sbr.rel (0) target = $region9
    $region8: #{tpu_custom_call.1} parent=1 // pred_region
      %s23 = ssub.s32 256, 256
      %24 = vsyncadd [#allocation6], %s23
      %s25 = sshll.u32 [#allocation5], 4
      %s26 = int_to_ptr.vmem [resolvable:$true] %s25
      %31 = dma.hbm_to_vmem [thread:$0]  %s1, 256, %s26, [#allocation6], 128, 128, 8
    $region9: #{tpu_custom_call.1} parent=1 // pred_fallthru
      _
    // Predicated region
    $region10: #{tpu_custom_call.1} parent=1 // pred_check
      _
    $region11: #{tpu_custom_call.1} parent=1 // pred_check_branch
      %33 = sbr.rel (0) target = $region13
    $region12: #{tpu_custom_call.1} parent=1 // pred_region
      %34 = dma.done [#allocation3], 128
    $region13: #{tpu_custom_call.1} parent=1 // pred_fallthru
      _
    // Predicated region
    $region14: #{tpu_custom_call.1} parent=1 // pred_check
      _
    $region15: #{tpu_custom_call.1} parent=1 // pred_check_branch
      %36 = sbr.rel (0) target = $region17
    $region16: #{tpu_custom_call.1} parent=1 // pred_region
      %37 = dma.done [#allocation6], 256
    $region17: #{tpu_custom_call.1} parent=1 // pred_fallthru
      _
    %v38 = vld [vmem:[#allocation2] sm:$0xf]
    %v39 = vld [vmem:[#allocation5] sm:$0xf]
    %v40 = vld [vmem:[#allocation5 + $0x4] sm:$0x1]
    %v41 = vsub.f32 %v38, %v39
    %v42 = vmul.f32 %v41, %v41
    %vm43 = vcmask 125952
    %v44 = vsel %vm43, %v42, 0.0
    %v45 = vrot.slane %v44, 4
    %v46 = vadd.f32 %v44, %v45
    %v47 = vrot.slane %v46, 2
    %v48 = vadd.f32 %v46, %v47
    %v49 = vrot.slane %v48, 1
    %v50 = vadd.f32 %v48, %v49
    %v51 = vadd.f32 %v50, 0.0
    %v52 = vadd.f32 %v40, 0.0
    %v53 = vld [vmem:[#allocation2 + $0x4] sm:$0xf]
    %v54 = vld [vmem:[#allocation5 + $0x5] sm:$0xf]
    %v55 = vld [vmem:[#allocation5 + $0x9] sm:$0x1]
    %v56 = vsub.f32 %v53, %v54
    %v57 = vmul.f32 %v56, %v56
    %v58 = vsel %vm43, %v57, 0.0
    %v59 = vrot.slane %v58, 4
    %v60 = vadd.f32 %v58, %v59
    %v61 = vrot.slane %v60, 2
    %v62 = vadd.f32 %v60, %v61
    %v63 = vrot.slane %v62, 1
    %v64 = vadd.f32 %v62, %v63
    %v65 = vadd.f32 %v51, %v64
    %v66 = vadd.f32 %v52, %v55
    %v67 = vmul.f32 %v66, %v65
    %vm68 = vcmask 122880
    %v69 = vsel %vm68, %v67, 0.0
    %70 = vadd.xlane.f32.xlu0 %v69
    %v71 = vpop.xlane.xlu0 %70
    %v72 = vrot.slane %v71, 4
    %v73 = vadd.f32 %v71, %v72
    %v74 = vrot.slane %v73, 2
    %v75 = vadd.f32 %v73, %v74
    %v76 = vrot.slane %v75, 1
    %v77 = vadd.f32 %v75, %v76
    %s78 = vtos %v77
    %s79 = scalar_lea.smem [#allocation7], 0
    %80 = sst [smem:[%s79]] %s78
    // Predicated region
    $region18: #{tpu_custom_call.1} parent=1 // pred_check
      _
    $region19: #{tpu_custom_call.1} parent=1 // pred_check_branch
      %82 = sbr.rel (0) target = $region21
    $region20: #{tpu_custom_call.1} parent=1 // pred_region
      %s84 = ssub.s32 16, 16
      %85 = vsyncadd [#allocation4], %s84
      %88 = dma.smem_to_hbm [#allocation7], 16, %s2, [#allocation4]
    $region21: #{tpu_custom_call.1} parent=1 // pred_fallthru
      _
    // Predicated region
    $region22: #{tpu_custom_call.1} parent=1 // pred_check
      _
    $region23: #{tpu_custom_call.1} parent=1 // pred_check_branch
      %90 = sbr.rel (0) target = $region25
    $region24: #{tpu_custom_call.1} parent=1 // pred_region
      %91 = dma.done [#allocation4], 16
    $region25: #{tpu_custom_call.1} parent=1 // pred_fallthru
      _
    %92 = sfence
    %93 = vsyncpa [#allocation3], 1
    %94 = vsyncpa [#allocation6], 1
    %95 = vsyncpa [#allocation4], 1

</llo_original>
